<compile_context>
chip_gen: v7x
topology: tpu7x:2x2x1
jax: 0.10.0
libtpu: 0.0.40
codegen_flags: <defaults>
</compile_context>

<pallas_src>
import functools

import numpy as np
import jax
import jax.numpy as jnp
from jax.experimental import pallas as pl
from jax.experimental.pallas import tpu as pltpu


# ----------------------------------------------------------------------------
# Pallas kernel: tiled matmul, accumulate into o_ref, fused bias + activation.
# ----------------------------------------------------------------------------
def _mm_kernel(a_ref, b_ref, bias_ref, o_ref, *, activation):
    @pl.when(pl.program_id(2) == 0)
    def _():
        o_ref[...] = jnp.zeros_like(o_ref)

    o_ref[...] += jnp.dot(a_ref[...], b_ref[...],
                          preferred_element_type=jnp.float32)

    @pl.when(pl.program_id(2) == pl.num_programs(2) - 1)
    def _():
        r = o_ref[...] + bias_ref[...]
        if activation == "relu":
            r = jnp.maximum(r, 0.0)
        elif activation == "leaky_relu":
            r = jnp.where(r > 0, r, 0.2 * r)
        o_ref[...] = r


def _round_up(x, m):
    return (x + m - 1) // m * m


@functools.partial(jax.jit, static_argnames=("activation",))
def matmul_bias_act(a, b, bias, activation="none"):
    """out = act(a @ b + bias) on the MXU (bf16 operands, f32 accumulate)."""
    M, K = a.shape
    K2, N = b.shape
    assert K == K2

    a = a.astype(jnp.bfloat16)
    b = b.astype(jnp.bfloat16)
    bias = bias.reshape(1, N).astype(jnp.float32)

    # --- adaptive tiles: never pad small full dims up to 128 ---------------
    tm = min(1024, _round_up(M, 8))
    Mp = _round_up(M, tm)
    if K <= 2048:
        tk, Kp = K, K                      # full-K block (legal as full dim)
    else:
        tk = 2048
        Kp = _round_up(K, tk)
    if N <= 256:
        tn, Np = N, N                      # full-N block (legal as full dim)
    elif N % 256 == 0:
        tn, Np = 256, N
    else:
        tn = 128
        Np = _round_up(N, tn)

    if Mp != M or Kp != K:
        a = jnp.pad(a, ((0, Mp - M), (0, Kp - K)))
    if Kp != K or Np != N:
        b = jnp.pad(b, ((0, Kp - K), (0, Np - N)))
    if Np != N:
        bias = jnp.pad(bias, ((0, 0), (0, Np - N)))

    out = pl.pallas_call(
        functools.partial(_mm_kernel, activation=activation),
        out_shape=jax.ShapeDtypeStruct((Mp, Np), jnp.float32),
        grid=(Mp // tm, Np // tn, Kp // tk),
        in_specs=[
            pl.BlockSpec((tm, tk), lambda i, j, k: (i, k)),
            pl.BlockSpec((tk, tn), lambda i, j, k: (k, j)),
            pl.BlockSpec((1, tn), lambda i, j, k: (0, j)),
        ],
        out_specs=pl.BlockSpec((tm, tn), lambda i, j, k: (i, j)),
        compiler_params=pltpu.CompilerParams(
            dimension_semantics=("parallel", "parallel", "arbitrary"),
            vmem_limit_bytes=32 * 1024 * 1024),
    )(a, b, bias)

    if Mp != M or Np != N:
        out = out[:M, :N]
    return out


# ----------------------------------------------------------------------------
# JAX glue built on top of the Pallas matmul.
# ----------------------------------------------------------------------------
def batchnorm(x, eps=1e-5):
    # TODO(synk): training-mode BatchNorm (batch stats, gamma=1/beta=0) stays
    # in plain JAX; stats need the full activation before normalization.
    axes = tuple(range(x.ndim - 1))
    mean = x.mean(axes, keepdims=True)
    var = x.var(axes, keepdims=True)
    return (x - mean) * jax.lax.rsqrt(var + eps)


def maxpool3d_2(x):
    B, D, H, W, C = x.shape
    Do, Ho, Wo = D // 2, H // 2, W // 2
    x = x[:, :Do * 2, :Ho * 2, :Wo * 2, :]
    x = x.reshape(B, Do, 2, Ho, 2, Wo, 2, C)
    return x.max(axis=(2, 4, 6))


def conv3d(x, w, b, padding, activation="none"):
    """Conv3d as a single im2col matmul.  x: NDHWC, w: (k,k,k,Ci,Co)."""
    B, D, H, W, Ci = x.shape
    k = w.shape[0]
    Co = w.shape[-1]
    xp = jnp.pad(x.astype(jnp.bfloat16),
                 ((0, 0), (padding,) * 2, (padding,) * 2, (padding,) * 2,
                  (0, 0)))
    Do = D + 2 * padding - k + 1
    Ho = H + 2 * padding - k + 1
    Wo = W + 2 * padding - k + 1
    cols = [xp[:, kd:kd + Do, kh:kh + Ho, kw:kw + Wo, :]
            for kd in range(k) for kh in range(k) for kw in range(k)]
    a = jnp.concatenate(cols, axis=-1).reshape(B * Do * Ho * Wo, k * k * k * Ci)
    y = matmul_bias_act(a, w.reshape(k * k * k * Ci, Co), b, activation)
    return y.reshape(B, Do, Ho, Wo, Co)


# phase -> (offsets into the 1-padded input, torch kernel indices), for
# ConvTranspose3d(kernel=4, stride=2, padding=1): out[2m]   = w[1] x[m] + w[3] x[m-1]
#                                                 out[2m+1] = w[2] x[m] + w[0] x[m+1]
_CT_OFF = {0: (0, 1), 1: (1, 2)}
_CT_KID = {0: (3, 1), 1: (2, 0)}


def conv_transpose3d(x, w):
    """ConvTranspose3d(k=4, s=2, p=1, bias=False) via 8-phase decomposition.

    w: (4,4,4,Ci,Co) with w[kd,kh,kw,ci,co] == torch_weight[ci,co,kd,kh,kw].
    """
    B, D, H, W, Ci = x.shape
    Co = w.shape[-1]
    xp = jnp.pad(x.astype(jnp.bfloat16),
                 ((0, 0), (1, 1), (1, 1), (1, 1), (0, 0)))
    zero = jnp.zeros((Co,), jnp.float32)

    phases = []
    for pd in (0, 1):
        for ph in (0, 1):
            for pw in (0, 1):
                cols, wts = [], []
                for ad in range(2):
                    for ah in range(2):
                        for aw in range(2):
                            od, oh, ow = (_CT_OFF[pd][ad], _CT_OFF[ph][ah],
                                          _CT_OFF[pw][aw])
                            cols.append(xp[:, od:od + D, oh:oh + H,
                                           ow:ow + W, :])
                            wts.append(w[_CT_KID[pd][ad], _CT_KID[ph][ah],
                                         _CT_KID[pw][aw]])
                a = jnp.concatenate(cols, axis=-1).reshape(B * D * H * W,
                                                           8 * Ci)
                wm = jnp.concatenate(wts, axis=0)           # (8*Ci, Co)
                phases.append(matmul_bias_act(a, wm, zero)
                              .reshape(B, D, H, W, Co))
    y = jnp.stack(phases, 0).reshape(2, 2, 2, B, D, H, W, Co)
    y = jnp.transpose(y, (3, 4, 0, 5, 1, 6, 2, 7))
    return y.reshape(B, 2 * D, 2 * H, 2 * W, Co)


def make_grid_points(w):
    d = 2.0 / w
    u = jnp.arange(w, dtype=jnp.float32)
    U, V, K = jnp.meshgrid(u, u, u, indexing="ij")   # torch loop order u,v,k
    return jnp.stack([-1 + d / 2 + U * d,
                      -1 + d / 2 + K * d,
                      1 - d / 2 - V * d], axis=-1).reshape(-1, 3)


# ----------------------------------------------------------------------------
# Parameters (deterministic synthetic init, matmul-friendly layouts).
# ----------------------------------------------------------------------------
def init_params(key, in_channel=6, n_cls=50):
    ks = jax.random.split(key, 32)

    def w_(k, shape, fan_in):
        return jax.random.normal(k, shape, jnp.float32) / np.sqrt(fan_in)

    def b_(k, n):
        return 0.01 * jax.random.normal(k, (n,), jnp.float32)

    p = {}
    p["p2v_w1"] = w_(ks[0], (in_channel, 64), in_channel)
    p["p2v_b1"] = b_(ks[1], 64)
    p["p2v_w2"] = w_(ks[2], (64, 64), 64)
    p["p2v_b2"] = b_(ks[3], 64)
    p["conv1_w"] = w_(ks[4], (4, 4, 4, 64, 64), 64 * 64)
    p["conv1_b"] = b_(ks[5], 64)
    p["conv2_w"] = w_(ks[6], (4, 4, 4, 64, 128), 64 * 64)
    p["conv2_b"] = b_(ks[7], 128)
    p["conv3_w"] = w_(ks[8], (4, 4, 4, 128, 256), 128 * 64)
    p["conv3_b"] = b_(ks[9], 256)
    p["conv4_w"] = w_(ks[10], (4, 4, 4, 256, 512), 256 * 64)
    p["conv4_b"] = b_(ks[11], 512)
    p["fc5_w"] = w_(ks[12], (4096, 2048), 4096)
    p["fc5_b"] = b_(ks[13], 2048)
    p["fc6_w"] = w_(ks[14], (2048, 4096), 2048)
    p["fc6_b"] = b_(ks[15], 4096)
    p["dconv7_w"] = w_(ks[16], (4, 4, 4, 512, 256), 512 * 64)
    p["dconv8_w"] = w_(ks[17], (4, 4, 4, 256, 128), 256 * 64)
    p["dconv9_w"] = w_(ks[18], (4, 4, 4, 128, 64), 128 * 64)
    p["dconv10_w"] = w_(ks[19], (4, 4, 4, 64, 64), 64 * 64)
    p["fc_w1"] = w_(ks[20], (128 + 16, 64), 144)            # no bias (torch)
    p["fc_w2"] = w_(ks[21], (64, n_cls), 64)
    p["fc_b2"] = b_(ks[22], n_cls)
    return p


# ----------------------------------------------------------------------------
# Forward pass (mirrors PVPSegNet.forward).
# ----------------------------------------------------------------------------
def pvp_segnet_forward(params, x, cls_, w=32, n_cls=50):
    B, N, _ = x.shape
    grid_points = make_grid_points(w)
    G = grid_points.shape[0]

    # square_distance + topk(k=1, largest=False) -> argmin voxel assignment
    # TODO(synk): nearest-voxel argmin stays in plain JAX.
    xyz = x[:, :, :3]
    dist = (jnp.sum(xyz ** 2, -1, keepdims=True)
            - 2.0 * jnp.einsum("bnd,gd->bng", xyz, grid_points)
            + jnp.sum(grid_points ** 2, -1)[None, None, :])
    grid_idx = jnp.argmin(dist, axis=2)                            # (B, N)

    zero64 = jnp.zeros((64,), jnp.float32)

    # point2vec: 1x1 Conv1d -> BN -> ReLU -> 1x1 Conv1d (per-point matmuls)
    pf = matmul_bias_act(x.reshape(B * N, -1),
                         params["p2v_w1"], params["p2v_b1"])
    pf = jnp.maximum(batchnorm(pf), 0.0)
    pf = matmul_bias_act(pf, params["p2v_w2"], params["p2v_b2"])
    point_feature = pf.reshape(B, N, 64)

    # point -> voxel scatter-mean (== normalized adjacency matmul) via
    # segment_sum; avoids the dense (B, 32768, N) one-hot matmul.
    seg = (grid_idx + jnp.arange(B, dtype=grid_idx.dtype)[:, None] * G)
    seg = seg.reshape(-1)
    sums = jax.ops.segment_sum(pf, seg, num_segments=B * G)
    cnts = jax.ops.segment_sum(jnp.ones((B * N,), jnp.float32), seg,
                               num_segments=B * G)
    p2v = sums / jnp.maximum(cnts, 1.0)[:, None]
    point2voxel = p2v.reshape(B, w, w, w, 64)                      # NDHWC

    def enc_block(v, wk, bk):
        # BN (batch stats) sits between conv and LeakyReLU, so the activation
        # cannot be fused into the matmul epilogue without changing semantics.
        y = conv3d(v, params[wk], params[bk], padding=2)
        y = batchnorm(y)
        y = jnp.where(y > 0, y, 0.2 * y)                           # LeakyReLU(0.2)
        return maxpool3d_2(y)

    v16 = enc_block(point2voxel, "conv1_w", "conv1_b")   # (B,16,16,16, 64)
    v8 = enc_block(v16, "conv2_w", "conv2_b")            # (B, 8, 8, 8,128)
    v4 = enc_block(v8, "conv3_w", "conv3_b")             # (B, 4, 4, 4,256)
    v2 = enc_block(v4, "conv4_w", "conv4_b")             # (B, 2, 2, 2,512)

    # bottleneck MLP (torch flattens NCDHW order); ReLU fused in-kernel
    v2_flat = jnp.transpose(v2, (0, 4, 1, 2, 3)).reshape(B, 512 * 2 * 2 * 2)
    feat = matmul_bias_act(v2_flat, params["fc5_w"], params["fc5_b"],
                           activation="relu")
    v2r_flat = matmul_bias_act(feat, params["fc6_w"], params["fc6_b"],
                               activation="relu")
    v2r = jnp.transpose(v2r_flat.reshape(B, 512, 2, 2, 2),
                        (0, 2, 3, 4, 1)) + v2

    def dec_block(v, wk):
        y = conv_transpose3d(v, params[wk])
        return jnp.maximum(batchnorm(y), 0.0)

    v4r = dec_block(v2r, "dconv7_w") + v4
    v8r = dec_block(v4r, "dconv8_w") + v8
    v16r = dec_block(v8r, "dconv9_w") + v16
    v32r = dec_block(v16r, "dconv10_w") + point2voxel

    # gather each point's voxel feature, concat with point feature + class vec
    vox_feat = v32r.reshape(B, G, 64)
    gathered = jnp.take_along_axis(vox_feat, grid_idx[:, :, None], axis=1)
    cls_rep = jnp.broadcast_to(cls_, (B, N, cls_.shape[-1]))
    pf_cat = jnp.concatenate([point_feature, gathered, cls_rep], axis=2)

    h = matmul_bias_act(pf_cat.reshape(B * N, -1), params["fc_w1"], zero64)
    h = jnp.maximum(batchnorm(h), 0.0)
    out = matmul_bias_act(h, params["fc_w2"], params["fc_b2"])
    return out.reshape(B, N, n_cls)


# ----------------------------------------------------------------------------
if __name__ == "__main__":
    key = jax.random.PRNGKey(0)
    k_param, k_xyz, k_feat, k_cls = jax.random.split(key, 4)

    # w=32 is required by the hard-coded 4096 = 512*2*2*2 bottleneck;
    # keep batch / point-count small.
    B, N, in_channel, w, n_cls = 2, 64, 6, 32, 50

    params = init_params(k_param, in_channel=in_channel, n_cls=n_cls)

    xyz = jax.random.uniform(k_xyz, (B, N, 3), jnp.float32, -1.0, 1.0)
    extra = jax.random.normal(k_feat, (B, N, in_channel - 3), jnp.float32)
    x = jnp.concatenate([xyz, extra], axis=2)                  # (B, N, 6)

    cls_id = jax.random.randint(k_cls, (B,), 0, 16)
    cls_ = jax.nn.one_hot(cls_id, 16, dtype=jnp.float32)[:, None, :]  # (B,1,16)

    out = pvp_segnet_forward(params, x, cls_, w=w, n_cls=n_cls)
    out = jax.block_until_ready(out)

    assert out.shape == (B, N, n_cls), out.shape
    assert bool(jnp.all(jnp.isfinite(out)))
    print("KERNEL_OK")
</pallas_src>

<mosaic_0001>
module attributes {stable_mosaic.version = 11 : i64} {
  func.func @_mm_kernel(%arg0: i32, %arg1: i32, %arg2: i32, %arg3: memref<128x6xbf16, #tpu.memory_space<vmem>>, %arg4: memref<6x64xbf16, #tpu.memory_space<vmem>>, %arg5: memref<1x64xf32, #tpu.memory_space<vmem>>, %arg6: memref<128x64xf32, #tpu.memory_space<vmem>>) attributes {dimension_semantics = [#tpu.dimension_semantics<parallel>, #tpu.dimension_semantics<parallel>, #tpu.dimension_semantics<arbitrary>], iteration_bounds = array<i64: 1, 1, 1>, scalar_prefetch = 0 : i64, scratch_operands = 0 : i64, tpu.core_type = #tpu.core_type<tc>, window_params = [{transform_indices = @transform_0, window_bounds = array<i64: 128, 6>}, {transform_indices = @transform_1, window_bounds = array<i64: 6, 64>}, {transform_indices = @transform_2, window_bounds = array<i64: 1, 64>}, {transform_indices = @transform_3, window_bounds = array<i64: 128, 64>}]} {
    %c0_i32 = arith.constant 0 : i32
    %0 = arith.cmpi eq, %arg2, %c0_i32 : i32
    %1 = arith.extui %0 : i1 to i32
    %c0_i32_0 = arith.constant 0 : i32
    %2 = arith.cmpi ne, %1, %c0_i32_0 : i32
    scf.if %2 {
      %cst_10 = arith.constant 0.000000e+00 : f32
      %12 = vector.broadcast %cst_10 : f32 to vector<128x64xf32>
      %c0_11 = arith.constant 0 : index
      %c0_12 = arith.constant 0 : index
      %13 = vector.load %arg6[%c0_11, %c0_12] : memref<128x64xf32, #tpu.memory_space<vmem>>, vector<128x64xf32>
      tpu.vector_store %arg6[%c0_11, %c0_12], %12 {strides = array<i32>} : memref<128x64xf32, #tpu.memory_space<vmem>>, vector<128x64xf32>,
    } else {
    }
    %c0 = arith.constant 0 : index
    %c0_1 = arith.constant 0 : index
    %3 = vector.load %arg6[%c0, %c0_1] : memref<128x64xf32, #tpu.memory_space<vmem>>, vector<128x64xf32>
    %c0_2 = arith.constant 0 : index
    %c0_3 = arith.constant 0 : index
    %4 = vector.load %arg3[%c0_2, %c0_3] : memref<128x6xbf16, #tpu.memory_space<vmem>>, vector<128x6xbf16>
    %c0_4 = arith.constant 0 : index
    %c0_5 = arith.constant 0 : index
    %5 = vector.load %arg4[%c0_4, %c0_5] : memref<6x64xbf16, #tpu.memory_space<vmem>>, vector<6x64xbf16>
    %cst = arith.constant dense<0.000000e+00> : vector<128x64xf32>
    %6 = tpu.matmul %4, %5, %cst {dimension_numbers = #tpu.dot_dimension_numbers<[1], [0], [0], [1], [0, 0, 1, 1], [], []>} : vector<128x6xbf16>, vector<6x64xbf16>, vector<128x64xf32> -> vector<128x64xf32>
    %7 = arith.addf %3, %6 : vector<128x64xf32>
    %c0_6 = arith.constant 0 : index
    %c0_7 = arith.constant 0 : index
    %8 = vector.load %arg6[%c0_6, %c0_7] : memref<128x64xf32, #tpu.memory_space<vmem>>, vector<128x64xf32>
    tpu.vector_store %arg6[%c0_6, %c0_7], %7 {strides = array<i32>} : memref<128x64xf32, #tpu.memory_space<vmem>>, vector<128x64xf32>,
    %c0_i32_8 = arith.constant 0 : i32
    %9 = arith.cmpi eq, %arg2, %c0_i32_8 : i32
    %10 = arith.extui %9 : i1 to i32
    %c0_i32_9 = arith.constant 0 : i32
    %11 = arith.cmpi ne, %10, %c0_i32_9 : i32
    scf.if %11 {
      %c0_10 = arith.constant 0 : index
      %c0_11 = arith.constant 0 : index
      %12 = vector.load %arg6[%c0_10, %c0_11] : memref<128x64xf32, #tpu.memory_space<vmem>>, vector<128x64xf32>
      %c0_12 = arith.constant 0 : index
      %c0_13 = arith.constant 0 : index
      %13 = vector.load %arg5[%c0_12, %c0_13] : memref<1x64xf32, #tpu.memory_space<vmem>>, vector<1x64xf32>
      %14 = vector.broadcast %13 : vector<1x64xf32> to vector<128x64xf32>
      %15 = arith.addf %12, %14 : vector<128x64xf32>
      %c0_14 = arith.constant 0 : index
      %c0_15 = arith.constant 0 : index
      %16 = vector.load %arg6[%c0_14, %c0_15] : memref<128x64xf32, #tpu.memory_space<vmem>>, vector<128x64xf32>
      tpu.vector_store %arg6[%c0_14, %c0_15], %15 {strides = array<i32>} : memref<128x64xf32, #tpu.memory_space<vmem>>, vector<128x64xf32>,
    } else {
    }
    return
  }
  func.func @transform_0(%arg0: i32, %arg1: i32, %arg2: i32) -> (i32, i32) {
    %c0_i32 = arith.constant 0 : i32
    return %arg0, %arg2 : i32, i32
  }
  func.func @transform_1(%arg0: i32, %arg1: i32, %arg2: i32) -> (i32, i32) {
    %c0_i32 = arith.constant 0 : i32
    return %arg2, %arg1 : i32, i32
  }
  func.func @transform_2(%arg0: i32, %arg1: i32, %arg2: i32) -> (i32, i32) {
    %c0_i32 = arith.constant 0 : i32
    %c0_i32_0 = arith.constant 0 : i32
    return %c0_i32, %arg1 : i32, i32
  }
  func.func @transform_3(%arg0: i32, %arg1: i32, %arg2: i32) -> (i32, i32) {
    %c0_i32 = arith.constant 0 : i32
    return %arg0, %arg1 : i32, i32
  }
}

</mosaic_0001>

<llo_original>
// kernel: matmul_bias_act.1
$region0: #{matmul_bias_act.1}
  #allocation0 [shape = 'u32[]', space=smem, size = 0x4, offset = 0x4, fixed_abs, tag = 'smem constant byte address 0x4 - core index']
  #allocation1 [shape = 'u32[144,128]{1,0:T(1,128)}', space=vmem, size = 0x12000, scoped, tag = 'internal scratch']
  %s0 = inlined_call_operand.vmem [shape: bf16[128,6], index: 0, kind: input, shape index: {}]
  %s1 = inlined_call_operand.vmem [shape: bf16[6,64], index: 1, kind: input, shape index: {}]
  %s2 = inlined_call_operand.vmem [shape: f32[1,64], index: 2, kind: input, shape index: {}]
  %s3 = inlined_call_operand.vmem [shape: f32[128,64], index: 3, kind: output, shape index: {}]
  %s4 = sld [smem:[#allocation0]]
  $region30: #{matmul_bias_act.1} parent=0
    _
  %s6 = ssub.s32 1, %s4
  %s7 = scalar_select 0, %s6, %s4
  // Predicated region
  $region2: #{matmul_bias_act.1} parent=0 // pred_check
    _
  $region3: #{matmul_bias_act.1} parent=0 // pred_check_branch
    %9 = sbr.rel (0) target = $region5
  $region4: #{matmul_bias_act.1} parent=0 // pred_region
    _
  $region5: #{matmul_bias_act.1} parent=0 // pred_fallthru
    _
  // Predicated region
  $region6: #{matmul_bias_act.1} parent=0 // pred_check
    _
  $region7: #{matmul_bias_act.1} parent=0 // pred_check_branch
    %11 = sbr.rel (0) target = $region9
  $region8: #{matmul_bias_act.1} parent=0 // pred_region
    _
  $region9: #{matmul_bias_act.1} parent=0 // pred_fallthru
    _
  // Predicated region
  $region10: #{matmul_bias_act.1} parent=0 // pred_check
    _
  $region11: #{matmul_bias_act.1} parent=0 // pred_check_branch
    %13 = sbr.rel (0) target = $region13
  $region12: #{matmul_bias_act.1} parent=0 // pred_region
    _
  $region13: #{matmul_bias_act.1} parent=0 // pred_fallthru
    _
  %p15 = scmp.eq.s32.totalorder 0, 0
  // Predicated region
  $region14: #{matmul_bias_act.1} parent=0 // pred_check
    %p16 = pneg %p15
  $region15: #{matmul_bias_act.1} parent=0 // pred_check_branch
    %18 = sbr.rel (%p16) target = $region17
  $region16: #{matmul_bias_act.1} parent=0 // pred_region
    %vm19 = vcmask 523264
    %20 = vst.msk [vmem:[%s3] sm:$0xff] %vm19, 0.0
    %21 = vst.msk [vmem:[%s3 + $0x8] sm:$0xff] %vm19, 0.0
    %22 = vst.msk [vmem:[%s3 + $0x10] sm:$0xff] %vm19, 0.0
    %23 = vst.msk [vmem:[%s3 + $0x18] sm:$0xff] %vm19, 0.0
    %24 = vst.msk [vmem:[%s3 + $0x20] sm:$0xff] %vm19, 0.0
    %25 = vst.msk [vmem:[%s3 + $0x28] sm:$0xff] %vm19, 0.0
    %26 = vst.msk [vmem:[%s3 + $0x30] sm:$0xff] %vm19, 0.0
    %27 = vst.msk [vmem:[%s3 + $0x38] sm:$0xff] %vm19, 0.0
    %28 = vst.msk [vmem:[%s3 + $0x40] sm:$0xff] %vm19, 0.0
    %29 = vst.msk [vmem:[%s3 + $0x48] sm:$0xff] %vm19, 0.0
    %30 = vst.msk [vmem:[%s3 + $0x50] sm:$0xff] %vm19, 0.0
    %31 = vst.msk [vmem:[%s3 + $0x58] sm:$0xff] %vm19, 0.0
    %32 = vst.msk [vmem:[%s3 + $0x60] sm:$0xff] %vm19, 0.0
    %33 = vst.msk [vmem:[%s3 + $0x68] sm:$0xff] %vm19, 0.0
    %34 = vst.msk [vmem:[%s3 + $0x70] sm:$0xff] %vm19, 0.0
    %35 = vst.msk [vmem:[%s3 + $0x78] sm:$0xff] %vm19, 0.0
  $region17: #{matmul_bias_act.1} parent=0 // pred_fallthru
    _
  %v36 = vld [vmem:[%s3] sm:$0xff]
  %v37 = vld [vmem:[%s3 + $0x8] sm:$0xff]
  %v38 = vld [vmem:[%s3 + $0x10] sm:$0xff]
  %v39 = vld [vmem:[%s3 + $0x18] sm:$0xff]
  %v40 = vld [vmem:[%s3 + $0x20] sm:$0xff]
  %v41 = vld [vmem:[%s3 + $0x28] sm:$0xff]
  %v42 = vld [vmem:[%s3 + $0x30] sm:$0xff]
  %v43 = vld [vmem:[%s3 + $0x38] sm:$0xff]
  %v44 = vld [vmem:[%s3 + $0x40] sm:$0xff]
  %v45 = vld [vmem:[%s3 + $0x48] sm:$0xff]
  %v46 = vld [vmem:[%s3 + $0x50] sm:$0xff]
  %v47 = vld [vmem:[%s3 + $0x58] sm:$0xff]
  %v48 = vld [vmem:[%s3 + $0x60] sm:$0xff]
  %v49 = vld [vmem:[%s3 + $0x68] sm:$0xff]
  %v50 = vld [vmem:[%s3 + $0x70] sm:$0xff]
  %v51 = vld [vmem:[%s3 + $0x78] sm:$0xff]
  %v52 = vld [vmem:[%s0] sm:$0xf]
  %v53 = vld [vmem:[%s0 + $0x4] sm:$0xf]
  %v54 = vld [vmem:[%s0 + $0x8] sm:$0xf]
  %v55 = vld [vmem:[%s0 + $0xc] sm:$0xf]
  %v56 = vld [vmem:[%s0 + $0x10] sm:$0xf]
  %v57 = vld [vmem:[%s0 + $0x14] sm:$0xf]
  %v58 = vld [vmem:[%s0 + $0x18] sm:$0xf]
  %v59 = vld [vmem:[%s0 + $0x1c] sm:$0xf]
  %v60 = vld [vmem:[%s0 + $0x20] sm:$0xf]
  %v61 = vld [vmem:[%s0 + $0x24] sm:$0xf]
  %v62 = vld [vmem:[%s0 + $0x28] sm:$0xf]
  %v63 = vld [vmem:[%s0 + $0x2c] sm:$0xf]
  %v64 = vld [vmem:[%s0 + $0x30] sm:$0xf]
  %v65 = vld [vmem:[%s0 + $0x34] sm:$0xf]
  %v66 = vld [vmem:[%s0 + $0x38] sm:$0xf]
  %v67 = vld [vmem:[%s0 + $0x3c] sm:$0xf]
  %v68 = vld [vmem:[%s1] sm:$0x7]
  %v85 = vunpack.c.l.b16 %v52
  %v86 = vunpack.c.l.b16 %v53
  %v87 = vunpack.c.l.b16 %v54
  %v88 = vunpack.c.l.b16 %v55
  %v89 = vunpack.c.l.b16 %v56
  %v90 = vunpack.c.l.b16 %v57
  %v91 = vunpack.c.l.b16 %v58
  %v92 = vunpack.c.l.b16 %v59
  %v93 = vunpack.c.l.b16 %v60
  %v94 = vunpack.c.l.b16 %v61
  %v95 = vunpack.c.l.b16 %v62
  %v96 = vunpack.c.l.b16 %v63
  %v97 = vunpack.c.l.b16 %v64
  %v98 = vunpack.c.l.b16 %v65
  %v99 = vunpack.c.l.b16 %v66
  %v100 = vunpack.c.l.b16 %v67
  %v101 = vpack.c.b16 %v86, %v85
  %v102 = vpack.c.b16 %v88, %v87
  %v103 = vpack.c.b16 %v90, %v89
  %v104 = vpack.c.b16 %v92, %v91
  %v105 = vpack.c.b16 %v94, %v93
  %v106 = vpack.c.b16 %v96, %v95
  %v107 = vpack.c.b16 %v98, %v97
  %v108 = vpack.c.b16 %v100, %v99
  %vm109 = vcmask 48128
  %v111 = vsel %vm109, %v101, 0
  %v114 = vsel %vm109, %v102, 0
  %v117 = vsel %vm109, %v103, 0
  %v120 = vsel %vm109, %v104, 0
  %v123 = vsel %vm109, %v105, 0
  %v126 = vsel %vm109, %v106, 0
  %v129 = vsel %vm109, %v107, 0
  %v132 = vsel %vm109, %v108, 0
  %vm134 = vcmask 1042432
  %v136 = vsel %vm134, %v68, 0
  %138 = vmatprep.subr.bf16.mxu0 0
  %139 = vmatpush1.bf16.msra.mxu0 %v136
  %140 = vmatprep.subr.bf16.mxu0 0
  %141 = vmatpush1.bf16.msra.mxu0 0
  %142 = vmatprep.subr.bf16.mxu0 0
  %143 = vmatpush1.bf16.msra.mxu0 0
  %144 = vmatprep.subr.bf16.mxu0 0
  %145 = vmatpush1.bf16.msra.mxu0 0
  %146 = vmatprep.subr.bf16.mxu0 0
  %147 = vmatpush1.bf16.msra.mxu0 0
  %148 = vmatprep.subr.bf16.mxu0 0
  %149 = vmatpush1.bf16.msra.mxu0 0
  %150 = vmatprep.subr.bf16.mxu0 0
  %151 = vmatpush1.bf16.msra.mxu0 0
  %152 = vmatprep.subr.bf16.mxu0 0
  %153 = vmatpush1.bf16.msra.mxu0 0
  %154 = vmatprep.subr.bf16.mxu0 0
  %155 = vmatpush1.bf16.msra.mxu0 0
  %156 = vmatprep.subr.bf16.mxu0 0
  %157 = vmatpush1.bf16.msra.mxu0 0
  %158 = vmatprep.subr.bf16.mxu0 0
  %159 = vmatpush1.bf16.msra.mxu0 0
  %160 = vmatprep.subr.bf16.mxu0 0
  %161 = vmatpush1.bf16.msra.mxu0 0
  %162 = vmatprep.subr.bf16.mxu0 0
  %163 = vmatpush1.bf16.msra.mxu0 0
  %164 = vmatprep.subr.bf16.mxu0 0
  %165 = vmatpush1.bf16.msra.mxu0 0
  %166 = vmatprep.subr.bf16.mxu0 0
  %167 = vmatpush1.bf16.msra.mxu0 0
  %168 = vmatprep.subr.bf16.mxu0 0
  %169 = vmatpush1.bf16.msra.mxu0 0
  %170 = vmatprep.mubr.bf16.mxu0 0
  %171 = vmatmul.mubr.bf16.gmra.mrb[0].mxu0 %v111
  %v172 = vpop.f32.mrb[0].mxu0
  %v173 = vadd.f32 0.0, %v172
  %v174 = vpop.f32.mrb[0].mxu0
  %v175 = vpop.f32.mrb[0].mxu0
  %v176 = vadd.f32 0.0, %v175
  %v177 = vpop.f32.mrb[0].mxu0
  %178 = vmatprep.mubr.bf16.mxu0 0
  %179 = vmatmul.mubr.bf16.gmra.mrb[0].mxu0 %v114
  %v180 = vpop.f32.mrb[0].mxu0
  %v181 = vadd.f32 0.0, %v180
  %v182 = vpop.f32.mrb[0].mxu0
  %v183 = vpop.f32.mrb[0].mxu0
  %v184 = vadd.f32 0.0, %v183
  %v185 = vpop.f32.mrb[0].mxu0
  %186 = vmatprep.mubr.bf16.mxu0 0
  %187 = vmatmul.mubr.bf16.gmra.mrb[0].mxu0 %v117
  %v188 = vpop.f32.mrb[0].mxu0
  %v189 = vadd.f32 0.0, %v188
  %v190 = vpop.f32.mrb[0].mxu0
  %v191 = vpop.f32.mrb[0].mxu0
  %v192 = vadd.f32 0.0, %v191
  %v193 = vpop.f32.mrb[0].mxu0
  %194 = vmatprep.mubr.bf16.mxu0 0
  %195 = vmatmul.mubr.bf16.gmra.mrb[0].mxu0 %v120
  %v196 = vpop.f32.mrb[0].mxu0
  %v197 = vadd.f32 0.0, %v196
  %v198 = vpop.f32.mrb[0].mxu0
  %v199 = vpop.f32.mrb[0].mxu0
  %v200 = vadd.f32 0.0, %v199
  %v201 = vpop.f32.mrb[0].mxu0
  %202 = vmatprep.mubr.bf16.mxu0 0
  %203 = vmatmul.mubr.bf16.gmra.mrb[0].mxu0 %v123
  %v204 = vpop.f32.mrb[0].mxu0
  %v205 = vadd.f32 0.0, %v204
  %v206 = vpop.f32.mrb[0].mxu0
  %v207 = vpop.f32.mrb[0].mxu0
  %v208 = vadd.f32 0.0, %v207
  %v209 = vpop.f32.mrb[0].mxu0
  %210 = vmatprep.mubr.bf16.mxu0 0
  %211 = vmatmul.mubr.bf16.gmra.mrb[0].mxu0 %v126
  %v212 = vpop.f32.mrb[0].mxu0
  %v213 = vadd.f32 0.0, %v212
  %v214 = vpop.f32.mrb[0].mxu0
  %v215 = vpop.f32.mrb[0].mxu0
  %v216 = vadd.f32 0.0, %v215
  %v217 = vpop.f32.mrb[0].mxu0
  %218 = vmatprep.mubr.bf16.mxu0 0
  %219 = vmatmul.mubr.bf16.gmra.mrb[0].mxu0 %v129
  %v220 = vpop.f32.mrb[0].mxu0
  %v221 = vadd.f32 0.0, %v220
  %v222 = vpop.f32.mrb[0].mxu0
  %v223 = vpop.f32.mrb[0].mxu0
  %v224 = vadd.f32 0.0, %v223
  %v225 = vpop.f32.mrb[0].mxu0
  %226 = vmatprep.mubr.bf16.mxu0 0
  %227 = vmatmul.mubr.bf16.gmra.mrb[0].mxu0 %v132
  %v228 = vpop.f32.mrb[0].mxu0
  %v229 = vadd.f32 0.0, %v228
  %v230 = vpop.f32.mrb[0].mxu0
  %v231 = vpop.f32.mrb[0].mxu0
  %v232 = vadd.f32 0.0, %v231
  %v233 = vpop.f32.mrb[0].mxu0
  %234 = vdwg.mxu0
  %v235 = vadd.f32 %v36, %v173
  %v236 = vadd.f32 %v37, %v176
  %v237 = vadd.f32 %v38, %v181
  %v238 = vadd.f32 %v39, %v184
  %v239 = vadd.f32 %v40, %v189
  %v240 = vadd.f32 %v41, %v192
  %v241 = vadd.f32 %v42, %v197
  %v242 = vadd.f32 %v43, %v200
  %v243 = vadd.f32 %v44, %v205
  %v244 = vadd.f32 %v45, %v208
  %v245 = vadd.f32 %v46, %v213
  %v246 = vadd.f32 %v47, %v216
  %v247 = vadd.f32 %v48, %v221
  %v248 = vadd.f32 %v49, %v224
  %v249 = vadd.f32 %v50, %v229
  %v250 = vadd.f32 %v51, %v232
  %vm251 = vcmask 523264
  %252 = vst.msk [vmem:[%s3] sm:$0xff] %vm251, %v235
  %253 = vst.msk [vmem:[%s3 + $0x8] sm:$0xff] %vm251, %v236
  %254 = vst.msk [vmem:[%s3 + $0x10] sm:$0xff] %vm251, %v237
  %255 = vst.msk [vmem:[%s3 + $0x18] sm:$0xff] %vm251, %v238
  %256 = vst.msk [vmem:[%s3 + $0x20] sm:$0xff] %vm251, %v239
  %257 = vst.msk [vmem:[%s3 + $0x28] sm:$0xff] %vm251, %v240
  %258 = vst.msk [vmem:[%s3 + $0x30] sm:$0xff] %vm251, %v241
  %259 = vst.msk [vmem:[%s3 + $0x38] sm:$0xff] %vm251, %v242
  %260 = vst.msk [vmem:[%s3 + $0x40] sm:$0xff] %vm251, %v243
  %261 = vst.msk [vmem:[%s3 + $0x48] sm:$0xff] %vm251, %v244
  %262 = vst.msk [vmem:[%s3 + $0x50] sm:$0xff] %vm251, %v245
  %263 = vst.msk [vmem:[%s3 + $0x58] sm:$0xff] %vm251, %v246
  %264 = vst.msk [vmem:[%s3 + $0x60] sm:$0xff] %vm251, %v247
  %265 = vst.msk [vmem:[%s3 + $0x68] sm:$0xff] %vm251, %v248
  %266 = vst.msk [vmem:[%s3 + $0x70] sm:$0xff] %vm251, %v249
  %267 = vst.msk [vmem:[%s3 + $0x78] sm:$0xff] %vm251, %v250
  // Predicated region
  $region18: #{matmul_bias_act.1} parent=0 // pred_check
    %p268 = pneg %p15
  $region19: #{matmul_bias_act.1} parent=0 // pred_check_branch
    %270 = sbr.rel (%p268) target = $region21
  $region20: #{matmul_bias_act.1} parent=0 // pred_region
    %v271 = vld [vmem:[%s3] sm:$0xff]
    %v272 = vld [vmem:[%s3 + $0x8] sm:$0xff]
    %v273 = vld [vmem:[%s3 + $0x10] sm:$0xff]
    %v274 = vld [vmem:[%s3 + $0x18] sm:$0xff]
    %v275 = vld [vmem:[%s3 + $0x20] sm:$0xff]
    %v276 = vld [vmem:[%s3 + $0x28] sm:$0xff]
    %v277 = vld [vmem:[%s3 + $0x30] sm:$0xff]
    %v278 = vld [vmem:[%s3 + $0x38] sm:$0xff]
    %v279 = vld [vmem:[%s3 + $0x40] sm:$0xff]
    %v280 = vld [vmem:[%s3 + $0x48] sm:$0xff]
    %v281 = vld [vmem:[%s3 + $0x50] sm:$0xff]
    %v282 = vld [vmem:[%s3 + $0x58] sm:$0xff]
    %v283 = vld [vmem:[%s3 + $0x60] sm:$0xff]
    %v284 = vld [vmem:[%s3 + $0x68] sm:$0xff]
    %v285 = vld [vmem:[%s3 + $0x70] sm:$0xff]
    %v286 = vld [vmem:[%s3 + $0x78] sm:$0xff]
    %v287 = vld [vmem:[%s2] sm:$0x1]
    %v289 = vlaneseq
    %v290 = vshrl.u32 %v289, 7
    %v291 = vsub.s32 0, %v290
    %v292 = vrot.slane %v287, %v291
    %v294 = vadd.f32 %v271, %v292
    %v295 = vadd.f32 %v272, %v292
    %v296 = vadd.f32 %v273, %v292
    %v297 = vadd.f32 %v274, %v292
    %v298 = vadd.f32 %v275, %v292
    %v299 = vadd.f32 %v276, %v292
    %v300 = vadd.f32 %v277, %v292
    %v301 = vadd.f32 %v278, %v292
    %v302 = vadd.f32 %v279, %v292
    %v303 = vadd.f32 %v280, %v292
    %v304 = vadd.f32 %v281, %v292
    %v305 = vadd.f32 %v282, %v292
    %v306 = vadd.f32 %v283, %v292
    %v307 = vadd.f32 %v284, %v292
    %v308 = vadd.f32 %v285, %v292
    %v309 = vadd.f32 %v286, %v292
    %310 = vst.msk [vmem:[%s3] sm:$0xff] %vm251, %v294
    %311 = vst.msk [vmem:[%s3 + $0x8] sm:$0xff] %vm251, %v295
    %312 = vst.msk [vmem:[%s3 + $0x10] sm:$0xff] %vm251, %v296
    %313 = vst.msk [vmem:[%s3 + $0x18] sm:$0xff] %vm251, %v297
    %314 = vst.msk [vmem:[%s3 + $0x20] sm:$0xff] %vm251, %v298
    %315 = vst.msk [vmem:[%s3 + $0x28] sm:$0xff] %vm251, %v299
    %316 = vst.msk [vmem:[%s3 + $0x30] sm:$0xff] %vm251, %v300
    %317 = vst.msk [vmem:[%s3 + $0x38] sm:$0xff] %vm251, %v301
    %318 = vst.msk [vmem:[%s3 + $0x40] sm:$0xff] %vm251, %v302
    %319 = vst.msk [vmem:[%s3 + $0x48] sm:$0xff] %vm251, %v303
    %320 = vst.msk [vmem:[%s3 + $0x50] sm:$0xff] %vm251, %v304
    %321 = vst.msk [vmem:[%s3 + $0x58] sm:$0xff] %vm251, %v305
    %322 = vst.msk [vmem:[%s3 + $0x60] sm:$0xff] %vm251, %v306
    %323 = vst.msk [vmem:[%s3 + $0x68] sm:$0xff] %vm251, %v307
    %324 = vst.msk [vmem:[%s3 + $0x70] sm:$0xff] %vm251, %v308
    %325 = vst.msk [vmem:[%s3 + $0x78] sm:$0xff] %vm251, %v309
  $region21: #{matmul_bias_act.1} parent=0 // pred_fallthru
    _
  // Predicated region
  $region22: #{matmul_bias_act.1} parent=0 // pred_check
    _
  $region23: #{matmul_bias_act.1} parent=0 // pred_check_branch
    %327 = sbr.rel (0) target = $region25
  $region24: #{matmul_bias_act.1} parent=0 // pred_region
    _
  $region25: #{matmul_bias_act.1} parent=0 // pred_fallthru
    _
  // Predicated region
  $region26: #{matmul_bias_act.1} parent=0 // pred_check
    _
  $region27: #{matmul_bias_act.1} parent=0 // pred_check_branch
    %329 = sbr.rel (0) target = $region29
  $region28: #{matmul_bias_act.1} parent=0 // pred_region
    _
  $region29: #{matmul_bias_act.1} parent=0 // pred_fallthru
    _

</llo_original>
